<compile_context>
chip_gen: v7x
topology: tpu7x:2x2x1
jax: 0.10.0
libtpu: 0.0.40
codegen_flags: <defaults>
</compile_context>

<pallas_src>
import jax
import jax.numpy as jnp
from jax.experimental import pallas as pl
from jax.experimental.pallas import tpu as pltpu


def _round_up(x, m):
    return (x + m - 1) // m * m


def _dec_kernel(x_ref, w1_ref, b1_ref, w2_ref, b2_ref, o_ref, h_ref):
    j = pl.program_id(1)

    # Hidden activations depend only on the row tile -> compute once per row
    # tile (first output-column step; with n_col==1 that is every step) and
    # keep them resident in VMEM scratch.
    @pl.when(j == 0)
    def _():
        h = jnp.dot(x_ref[...], w1_ref[...], preferred_element_type=jnp.float32)
        h = jnp.maximum(h + b1_ref[...], 0.0)          # folded BN1 shift + ReLU
        h_ref[...] = h.astype(h_ref.dtype)             # bf16 for the 2nd matmul

    y = jnp.dot(h_ref[...], w2_ref[...], preferred_element_type=jnp.float32)
    o_ref[...] = (y + b2_ref[...]).astype(o_ref.dtype)  # folded BN2 shift


def prepare_params(params):
    """Fold BN scales into weight columns, pad to lane multiples, cast to bf16.

    Call ONCE outside the per-step path (weights are constants); under jit
    this removes the per-call fold/pad/cast HBM passes.
    """
    w1, s1, b1 = params["w1"], params["bn1_scale"], params["bn1_shift"]
    w2, s2, b2 = params["w2"], params["bn2_scale"], params["bn2_shift"]
    in_f, hid = w1.shape
    out_f = w2.shape[1]

    in_f_p = _round_up(in_f, 128)
    hid_p = _round_up(hid, 128)
    out_f_p = _round_up(out_f, 128)

    w1f = w1 * s1[None, :]
    w2f = w2 * s2[None, :]
    w1p = jnp.pad(w1f, ((0, in_f_p - in_f), (0, hid_p - hid))).astype(jnp.bfloat16)
    w2p = jnp.pad(w2f, ((0, hid_p - hid), (0, out_f_p - out_f))).astype(jnp.bfloat16)
    b1p = jnp.pad(b1, (0, hid_p - hid)).reshape(1, hid_p).astype(jnp.float32)
    b2p = jnp.pad(b2, (0, out_f_p - out_f)).reshape(1, out_f_p).astype(jnp.float32)

    return {"w1": w1p, "b1": b1p, "w2": w2p, "b2": b2p,
            "in_f": in_f, "hid": hid, "out_f": out_f}


def instrument_backbone_dec(x, prepared, shapes, nb_output_bins, *,
                            tile_rows=512, col_tile=6144,
                            out_dtype=jnp.float32):
    """x: (nb_frames, nb_samples, hidden_size*nb_channels) float32."""
    nb_frames, nb_samples = shapes[0], shapes[1]
    nb_channels = 2

    w1p, b1p = prepared["w1"], prepared["b1"]
    w2p, b2p = prepared["w2"], prepared["b2"]
    in_f, out_f = prepared["in_f"], prepared["out_f"]
    in_f_p, hid_p = w1p.shape
    out_f_p = w2p.shape[1]

    x2 = x.reshape(-1, x.shape[-1])
    n_rows = x2.shape[0]

    # ----- Row tiling: bound padding waste (<~12.5%); keep >= 2 row tiles
    # when possible so v7x's 2 TensorCores both get work on the parallel axis.
    tile_rows = max(8, min(tile_rows, _round_up(n_rows, 8)))
    while tile_rows > 8 and (_round_up(n_rows, tile_rows) - n_rows) * 8 > n_rows:
        tile_rows = _round_up(tile_rows // 2, 8)
    if n_rows >= 16 and _round_up(n_rows, tile_rows) // tile_rows < 2:
        tile_rows = _round_up((n_rows + 1) // 2, 8)
    n_rows_p = _round_up(n_rows, tile_rows)
    n_row_tiles = n_rows_p // tile_rows

    # ----- Column tiling: single tile (w2 streamed once) unless out_f is huge.
    if out_f_p <= col_tile:
        n_col, tn = 1, out_f_p
    else:
        n_col = pl.cdiv(out_f_p, col_tile)
        tn = _round_up(pl.cdiv(out_f_p, n_col), 256)   # 256-aligned for 2x256^2 MXU
        n_col = pl.cdiv(out_f_p, tn)
    out_f_pp = n_col * tn
    if out_f_pp > out_f_p:
        w2p = jnp.pad(w2p, ((0, 0), (0, out_f_pp - out_f_p)))
        b2p = jnp.pad(b2p, ((0, 0), (0, out_f_pp - out_f_p)))
        out_f_p = out_f_pp

    # ----- Pad / cast the activation (only pad when actually needed).
    pad_rows = n_rows_p - n_rows
    pad_cols = in_f_p - in_f
    if pad_rows or pad_cols:
        x2 = jnp.pad(x2, ((0, pad_rows), (0, pad_cols)))
    x2p = x2.astype(jnp.bfloat16)

    out_bpe = jnp.dtype(out_dtype).itemsize

    # VMEM budget (double-buffered in/out tiles + bf16 hidden scratch).
    vmem_est = (2 * (tile_rows * in_f_p * 2 + tile_rows * tn * out_bpe)
                + 2 * (in_f_p * hid_p * 2 + hid_p * tn * 2)
                + 2 * (hid_p + tn) * 4
                + tile_rows * hid_p * 2)
    vmem_limit = int(min(64 * 1024 * 1024,
                         max(32 * 1024 * 1024, vmem_est * 5 // 4 + (4 << 20))))

    # Honest cost estimate (w2/b2 re-streamed per row tile only if n_col > 1).
    flops = 2 * n_rows_p * (in_f_p * hid_p + hid_p * out_f_p)
    w2_streams = 1 if n_col == 1 else n_row_tiles
    bytes_accessed = (x2p.size * 2 + w1p.size * 2 + b1p.size * 4
                      + (w2p.size * 2 + b2p.size * 4) * w2_streams
                      + n_rows_p * out_f_p * out_bpe)

    out = pl.pallas_call(
        _dec_kernel,
        out_shape=jax.ShapeDtypeStruct((n_rows_p, out_f_p), out_dtype),
        grid_spec=pltpu.PrefetchScalarGridSpec(
            num_scalar_prefetch=0,
            grid=(n_row_tiles, n_col),
            in_specs=[
                pl.BlockSpec((tile_rows, in_f_p), lambda i, j: (i, 0)),
                pl.BlockSpec((in_f_p, hid_p), lambda i, j: (0, 0)),
                pl.BlockSpec((1, hid_p), lambda i, j: (0, 0)),
                pl.BlockSpec((hid_p, tn), lambda i, j: (0, j)),
                pl.BlockSpec((1, tn), lambda i, j: (0, j)),
            ],
            out_specs=pl.BlockSpec((tile_rows, tn), lambda i, j: (i, j)),
            scratch_shapes=[pltpu.VMEM((tile_rows, hid_p), jnp.bfloat16)],
        ),
        compiler_params=pltpu.CompilerParams(
            dimension_semantics=("parallel", "arbitrary"),
            vmem_limit_bytes=vmem_limit,
        ),
        cost_estimate=pl.CostEstimate(
            flops=int(flops), transcendentals=0,
            bytes_accessed=int(bytes_accessed)),
    )(x2p, w1p, b1p, w2p, b2p)

    # Slice only if padding was actually introduced (avoid a needless second
    # full-size HBM copy in the fully-aligned case).
    if n_rows_p != n_rows:
        out = out[:n_rows]
    if out_f_p != out_f:
        out = out[:, :out_f]
    return out.reshape(nb_frames, nb_samples, nb_channels, nb_output_bins)


def make_params(key, hidden_size, nb_channels, nb_output_bins, eps=1e-5):
    """Deterministic synthetic parameters matching the PyTorch module shapes."""
    in_f = hidden_size * nb_channels
    out_f = nb_output_bins * nb_channels
    k = jax.random.split(key, 8)

    # Linear weights (PyTorch stores (out,in); we store pre-transposed (in,out)).
    w1 = jax.random.normal(k[0], (in_f, hidden_size), jnp.float32) * 0.05
    w2 = jax.random.normal(k[1], (hidden_size, out_f), jnp.float32) * 0.05

    # BatchNorm1d(hidden_size): gamma, beta, running_mean, running_var.
    g1 = 1.0 + 0.1 * jax.random.normal(k[2], (hidden_size,), jnp.float32)
    be1 = 0.1 * jax.random.normal(k[3], (hidden_size,), jnp.float32)
    rm1 = 0.05 * jax.random.normal(k[4], (hidden_size,), jnp.float32)
    rv1 = 1.0 + 0.1 * jax.random.uniform(k[5], (hidden_size,), jnp.float32)

    # BatchNorm1d(out_f)
    g2 = 1.0 + 0.1 * jax.random.normal(k[6], (out_f,), jnp.float32)
    be2 = 0.1 * jax.random.normal(k[7], (out_f,), jnp.float32)
    rm2 = jnp.linspace(-0.1, 0.1, out_f, dtype=jnp.float32)
    rv2 = jnp.full((out_f,), 1.2, jnp.float32)

    # Eval-mode BN fold -> per-feature scale/shift.
    s1 = g1 / jnp.sqrt(rv1 + eps)
    b1 = be1 - rm1 * s1
    s2 = g2 / jnp.sqrt(rv2 + eps)
    b2 = be2 - rm2 * s2

    return {
        "w1": w1, "bn1_scale": s1, "bn1_shift": b1,
        "w2": w2, "bn2_scale": s2, "bn2_shift": b2,
    }


def _reference(x, params, shapes, nb_output_bins):
    """Plain-JAX (f32) reference for correctness checking."""
    nb_frames, nb_samples = shapes[0], shapes[1]
    x2 = x.reshape(-1, x.shape[-1])
    h = x2 @ params["w1"]
    h = h * params["bn1_scale"][None, :] + params["bn1_shift"][None, :]
    h = jnp.maximum(h, 0.0)
    y = h @ params["w2"]
    y = y * params["bn2_scale"][None, :] + params["bn2_shift"][None, :]
    return y.reshape(nb_frames, nb_samples, 2, nb_output_bins)


if __name__ == "__main__":
    # Small shapes consistent with the module.
    nb_frames = 8
    nb_samples = 2
    nb_channels = 2
    hidden_size = 32
    nb_output_bins = 16

    key = jax.random.PRNGKey(0)
    kx, kp = jax.random.split(key)

    # Decoder input: (frames, samples, hidden_size * nb_channels)
    x = jax.random.normal(
        kx, (nb_frames, nb_samples, hidden_size * nb_channels), jnp.float32)
    params = make_params(kp, hidden_size, nb_channels, nb_output_bins)

    # Fold/pad/cast the weights ONCE, outside the per-call path.
    prepared = prepare_params(params)

    shapes = (nb_frames, nb_samples, nb_channels, nb_output_bins)
    out = instrument_backbone_dec(x, prepared, shapes, nb_output_bins)
    out = jax.block_until_ready(out)

    ref = _reference(x, params, shapes, nb_output_bins)
    assert out.shape == (nb_frames, nb_samples, 2, nb_output_bins)
    # bf16 MXU operands -> loosened tolerance vs the f32 reference.
    assert jnp.allclose(out, ref, atol=2e-2, rtol=2e-2), (
        float(jnp.max(jnp.abs(out - ref))))

    print("KERNEL_OK")
</pallas_src>

<mosaic_0001>
module attributes {stable_mosaic.version = 11 : i64} {
  func.func @_dec_kernel(%arg0: i32, %arg1: i32, %arg2: memref<8x128xbf16, #tpu.memory_space<vmem>>, %arg3: memref<128x128xbf16, #tpu.memory_space<vmem>>, %arg4: memref<1x128xf32, #tpu.memory_space<vmem>>, %arg5: memref<128x128xbf16, #tpu.memory_space<vmem>>, %arg6: memref<1x128xf32, #tpu.memory_space<vmem>>, %arg7: memref<8x128xf32, #tpu.memory_space<vmem>>, %arg8: memref<8x128xbf16, #tpu.memory_space<vmem>>) attributes {dimension_semantics = [#tpu.dimension_semantics<parallel>, #tpu.dimension_semantics<arbitrary>], iteration_bounds = array<i64: 2, 1>, scalar_prefetch = 0 : i64, scratch_operands = 1 : i64, tpu.core_type = #tpu.core_type<tc>, window_params = [{transform_indices = @transform_0, window_bounds = array<i64: 8, 128>}, {pipeline_mode = #tpu.pipeline_mode<synchronous>, transform_indices = @transform_1, window_bounds = array<i64: 128, 128>}, {pipeline_mode = #tpu.pipeline_mode<synchronous>, transform_indices = @transform_2, window_bounds = array<i64: 1, 128>}, {transform_indices = @transform_3, window_bounds = array<i64: 128, 128>}, {transform_indices = @transform_4, window_bounds = array<i64: 1, 128>}, {transform_indices = @transform_5, window_bounds = array<i64: 8, 128>}]} {
    %c0_i32 = arith.constant 0 : i32
    %0 = arith.cmpi eq, %arg1, %c0_i32 : i32
    %1 = arith.extui %0 : i1 to i32
    %c0_i32_0 = arith.constant 0 : i32
    %2 = arith.cmpi ne, %1, %c0_i32_0 : i32
    scf.if %2 {
      %c0_8 = arith.constant 0 : index
      %c0_9 = arith.constant 0 : index
      %10 = vector.load %arg2[%c0_8, %c0_9] : memref<8x128xbf16, #tpu.memory_space<vmem>>, vector<8x128xbf16>
      %c0_10 = arith.constant 0 : index
      %c0_11 = arith.constant 0 : index
      %11 = vector.load %arg3[%c0_10, %c0_11] : memref<128x128xbf16, #tpu.memory_space<vmem>>, vector<128x128xbf16>
      %cst_12 = arith.constant dense<0.000000e+00> : vector<8x128xf32>
      %12 = tpu.matmul %10, %11, %cst_12 {dimension_numbers = #tpu.dot_dimension_numbers<[1], [0], [0], [1], [0, 0, 1, 1], [], []>} : vector<8x128xbf16>, vector<128x128xbf16>, vector<8x128xf32> -> vector<8x128xf32>
      %c0_13 = arith.constant 0 : index
      %c0_14 = arith.constant 0 : index
      %13 = vector.load %arg4[%c0_13, %c0_14] : memref<1x128xf32, #tpu.memory_space<vmem>>, vector<1x128xf32>
      %14 = vector.broadcast %13 : vector<1x128xf32> to vector<8x128xf32>
      %15 = arith.addf %12, %14 : vector<8x128xf32>
      %cst_15 = arith.constant 0.000000e+00 : f32
      %16 = vector.broadcast %cst_15 : f32 to vector<8x128xf32>
      %17 = arith.maximumf %15, %16 : vector<8x128xf32>
      %18 = arith.truncf %17 : vector<8x128xf32> to vector<8x128xbf16>
      %c0_16 = arith.constant 0 : index
      %c0_17 = arith.constant 0 : index
      %19 = vector.load %arg8[%c0_16, %c0_17] : memref<8x128xbf16, #tpu.memory_space<vmem>>, vector<8x128xbf16>
      tpu.vector_store %arg8[%c0_16, %c0_17], %18 {strides = array<i32>} : memref<8x128xbf16, #tpu.memory_space<vmem>>, vector<8x128xbf16>,
    } else {
    }
    %c0 = arith.constant 0 : index
    %c0_1 = arith.constant 0 : index
    %3 = vector.load %arg8[%c0, %c0_1] : memref<8x128xbf16, #tpu.memory_space<vmem>>, vector<8x128xbf16>
    %c0_2 = arith.constant 0 : index
    %c0_3 = arith.constant 0 : index
    %4 = vector.load %arg5[%c0_2, %c0_3] : memref<128x128xbf16, #tpu.memory_space<vmem>>, vector<128x128xbf16>
    %cst = arith.constant dense<0.000000e+00> : vector<8x128xf32>
    %5 = tpu.matmul %3, %4, %cst {dimension_numbers = #tpu.dot_dimension_numbers<[1], [0], [0], [1], [0, 0, 1, 1], [], []>} : vector<8x128xbf16>, vector<128x128xbf16>, vector<8x128xf32> -> vector<8x128xf32>
    %c0_4 = arith.constant 0 : index
    %c0_5 = arith.constant 0 : index
    %6 = vector.load %arg6[%c0_4, %c0_5] : memref<1x128xf32, #tpu.memory_space<vmem>>, vector<1x128xf32>
    %7 = vector.broadcast %6 : vector<1x128xf32> to vector<8x128xf32>
    %8 = arith.addf %5, %7 : vector<8x128xf32>
    %c0_6 = arith.constant 0 : index
    %c0_7 = arith.constant 0 : index
    %9 = vector.load %arg7[%c0_6, %c0_7] : memref<8x128xf32, #tpu.memory_space<vmem>>, vector<8x128xf32>
    tpu.vector_store %arg7[%c0_6, %c0_7], %8 {strides = array<i32>} : memref<8x128xf32, #tpu.memory_space<vmem>>, vector<8x128xf32>,
    return
  }
  func.func @transform_0(%arg0: i32, %arg1: i32) -> (i32, i32) {
    %c0_i32 = arith.constant 0 : i32
    %c0_i32_0 = arith.constant 0 : i32
    return %arg0, %c0_i32 : i32, i32
  }
  func.func @transform_1(%arg0: i32, %arg1: i32) -> (i32, i32) {
    %c0_i32 = arith.constant 0 : i32
    %c0_i32_0 = arith.constant 0 : i32
    %c0_i32_1 = arith.constant 0 : i32
    return %c0_i32, %c0_i32_0 : i32, i32
  }
  func.func @transform_2(%arg0: i32, %arg1: i32) -> (i32, i32) {
    %c0_i32 = arith.constant 0 : i32
    %c0_i32_0 = arith.constant 0 : i32
    %c0_i32_1 = arith.constant 0 : i32
    return %c0_i32, %c0_i32_0 : i32, i32
  }
  func.func @transform_3(%arg0: i32, %arg1: i32) -> (i32, i32) {
    %c0_i32 = arith.constant 0 : i32
    %c0_i32_0 = arith.constant 0 : i32
    return %c0_i32, %arg1 : i32, i32
  }
  func.func @transform_4(%arg0: i32, %arg1: i32) -> (i32, i32) {
    %c0_i32 = arith.constant 0 : i32
    %c0_i32_0 = arith.constant 0 : i32
    return %c0_i32, %arg1 : i32, i32
  }
  func.func @transform_5(%arg0: i32, %arg1: i32) -> (i32, i32) {
    %c0_i32 = arith.constant 0 : i32
    return %arg0, %arg1 : i32, i32
  }
}

</mosaic_0001>

<llo_original>
// kernel: tpu_custom_call.1
$region0: #{tpu_custom_call.1}
  #allocation0 [shape = 'u32[]', space=smem, size = 0x4, offset = 0x4, fixed_abs, tag = 'smem constant byte address 0x4 - core index']
  #allocation1 [shape = 'u32[144,128]{1,0:T(1,128)}', space=vmem, size = 0x12000, scoped, tag = 'internal scratch']
  #allocation2 [shape = 'bf16[8,128]{1,0:T(8,128)(2,1)}', space=vmem, size = 0x800, scoped, tag = 'scratch operand']
  %s0 = inlined_call_operand.hbm [shape: bf16[16,128], index: 0, kind: input, shape index: {}]
  %s1 = inlined_call_operand.hbm [shape: bf16[128,128], index: 1, kind: input, shape index: {}]
  %s2 = inlined_call_operand.vmem [shape: f32[1,128], index: 2, kind: input, shape index: {}]
  %s3 = inlined_call_operand.hbm [shape: bf16[128,128], index: 3, kind: input, shape index: {}]
  %s4 = inlined_call_operand.vmem [shape: f32[1,128], index: 4, kind: input, shape index: {}]
  %s5 = inlined_call_operand.hbm [shape: f32[16,128], index: 5, kind: output, shape index: {}]
  %s6 = sld [smem:[#allocation0]]
  $region69: #{tpu_custom_call.1} parent=0
    _
  %s8 = ssub.s32 1, %s6
  %s9 = scalar_select 0, %s8, %s6
  $region1: #{tpu_custom_call.1} parent=0
    #allocation3 [shape = 'u8[4096]{0}', space=vmem, size = 0x1000, scoped, tag = 'input window, operand 0']
    #allocation4 [shape = 's32[2]{0}', space=sflag, size = 0x8, scoped, tag = 'scoped memory for tpu_custom_call.1']
    #allocation5 [shape = 's32[2]{0}', space=sflag, size = 0x8, scoped, tag = 'scoped memory for tpu_custom_call.1']
    #allocation6 [shape = 'u8[32768]{0}', space=vmem, size = 0x8000, scoped, tag = 'input window, operand 1, single buffered']
    #allocation7 [shape = 's32[1]{0}', space=sflag, size = 0x4, scoped, tag = 'scoped memory for tpu_custom_call.1']
    #allocation8 [shape = 'u8[32768]{0}', space=vmem, size = 0x8000, scoped, tag = 'input window, operand 3, single buffered']
    #allocation9 [shape = 'u8[8192]{0}', space=vmem, size = 0x2000, scoped, tag = 'output window, operand 0']
    %10 = vsyncpa [#allocation4], 0
    %s11 = scalar_lea.sflag [#allocation4], 1
    %12 = vsyncpa %s11, 0
    %13 = vsyncpa [#allocation7], 0
    %14 = vsyncpa [#allocation5], 0
    %s15 = scalar_lea.sflag [#allocation5], 1
    %16 = vsyncpa %s15, 0
    loop: start=0, step=1, limit=4
    $region2: #{tpu_custom_call.1} parent=1 // loop_pre_header
      _
    $region3: #{tpu_custom_call.1} parent=1 // loop_header
      %s18 = sphi 0, %s22
      %p19 = scmp.ge.s32.totalorder %s18, 4
      %s25 = sphi 0, %s37
      %s26 = sphi 0, %s33
      %s27 = sphi 0, %s25
      %s28 = sphi 0, %s26
      %s29 = sphi 0, %s27
      %s30 = sphi 0, %s28
      %s40 = sphi 0, %s42
      %s43 = sphi 0, %s40
      %s44 = sphi 0, %s43
      %s60 = sphi 0, %s44
      %s64 = sphi 0, %s64
      %s66 = sphi 0, %s64
      %s67 = sphi 0, %s66
      %s81 = sphi 0, %s67
      %s85 = sphi 0, %s85
      %s87 = sphi 0, %s85
      %s88 = sphi 0, %s87
      %s102 = sphi 0, %s88
      %s108 = sphi 0, %s110
      %s111 = sphi 0, %s108
      %s112 = sphi 0, %s111
      %s128 = sphi 0, %s112
      %s134 = sphi 0, %s136
      %s137 = sphi 0, %s134
      %s138 = sphi 0, %s137
      %s154 = sphi 0, %s138
      %s162 = sphi 0, %s164
      %s165 = sphi 0, %s162
      %s166 = sphi 0, %s165
      %s182 = sphi 0, %s166
    $region4: #{tpu_custom_call.1} parent=1 // loop_header_branch
      %21 = sbr.rel (%p19) target = $region8
    $region5: #{tpu_custom_call.1} parent=1 // loop_body
      %s23 = ssub.s32 %s18, 1
      %s24 = ssub.s32 %s18, 2
      %s31 = sadd.s32 1, %s26
      %p32 = scmp.ge.s32.totalorder %s31, 1
      %s33 = scalar_select %p32, 0, %s31
      %s34 = sadd.s32 1, %s25
      %s35 = scalar_select %p32, %s34, %s25
      %p36 = scmp.ge.s32.totalorder %s35, 2
      %s37 = scalar_select %p36, 0, %s35
      %s38 = ssub.s32 %s25, %s37
      %p39 = scmp.eq.s32.totalorder %s38, 0
      %s41 = sadd.s32 %s40, 1
      %s42 = scalar_select %p39, %s40, %s41
      %p45 = pneg %p39
      %p46 = scmp.eq.s32.totalorder %s18, 1
      %p47 = por %p45, %p46
      %p48 = scmp.ne.s32.totalorder %s40, %s43
      %p49 = scmp.eq.s32.totalorder %s18, 0
      %p50 = por %p48, %p49
      %p51 = scmp.ne.s32.totalorder %s40, %s43
      %p52 = scmp.eq.s32.totalorder %s23, 1
      %p53 = por %p51, %p52
      %p54 = scmp.ne.s32.totalorder %s43, %s44
      %p55 = scmp.eq.s32.totalorder %s23, 0
      %p56 = por %p54, %p55
      %p57 = scmp.ne.s32.totalorder %s43, %s44
      %p58 = scmp.eq.s32.totalorder %s24, 1
      %p59 = por %p57, %p58
      %p61 = scmp.ne.s32.totalorder %s44, %s60
      %p62 = scmp.eq.s32.totalorder %s24, 0
      %p63 = por %p61, %p62
      %s65 = sadd.s32 %s64, 1
      %p68 = scmp.eq.s32.totalorder %s18, 1
      %p69 = scmp.ne.s32.totalorder %s64, %s66
      %p70 = scmp.eq.s32.totalorder %s18, 0
      %p71 = por %p69, %p70
      %p72 = scmp.ne.s32.totalorder %s64, %s66
      %p73 = scmp.eq.s32.totalorder %s23, 1
      %p74 = por %p72, %p73
      %p75 = scmp.ne.s32.totalorder %s66, %s67
      %p76 = scmp.eq.s32.totalorder %s23, 0
      %p77 = por %p75, %p76
      %p78 = scmp.ne.s32.totalorder %s66, %s67
      %p79 = scmp.eq.s32.totalorder %s24, 1
      %p80 = por %p78, %p79
      %p82 = scmp.ne.s32.totalorder %s67, %s81
      %p83 = scmp.eq.s32.totalorder %s24, 0
      %p84 = por %p82, %p83
      %s86 = sadd.s32 %s85, 1
      %p89 = scmp.eq.s32.totalorder %s18, 1
      %p90 = scmp.ne.s32.totalorder %s85, %s87
      %p91 = scmp.eq.s32.totalorder %s18, 0
      %p92 = por %p90, %p91
      %p93 = scmp.ne.s32.totalorder %s85, %s87
      %p94 = scmp.eq.s32.totalorder %s23, 1
      %p95 = por %p93, %p94
      %p96 = scmp.ne.s32.totalorder %s87, %s88
      %p97 = scmp.eq.s32.totalorder %s23, 0
      %p98 = por %p96, %p97
      %p99 = scmp.ne.s32.totalorder %s87, %s88
      %p100 = scmp.eq.s32.totalorder %s24, 1
      %p101 = por %p99, %p100
      %p103 = scmp.ne.s32.totalorder %s88, %s102
      %p104 = scmp.eq.s32.totalorder %s24, 0
      %p105 = por %p103, %p104
      %s106 = ssub.s32 %s26, %s33
      %p107 = scmp.eq.s32.totalorder %s106, 0
      %s109 = sadd.s32 %s108, 1
      %s110 = scalar_select %p107, %s108, %s109
      %p113 = pneg %p107
      %p114 = scmp.eq.s32.totalorder %s18, 1
      %p115 = por %p113, %p114
      %p116 = scmp.ne.s32.totalorder %s108, %s111
      %p117 = scmp.eq.s32.totalorder %s18, 0
      %p118 = por %p116, %p117
      %p119 = scmp.ne.s32.totalorder %s108, %s111
      %p120 = scmp.eq.s32.totalorder %s23, 1
      %p121 = por %p119, %p120
      %p122 = scmp.ne.s32.totalorder %s111, %s112
      %p123 = scmp.eq.s32.totalorder %s23, 0
      %p124 = por %p122, %p123
      %p125 = scmp.ne.s32.totalorder %s111, %s112
      %p126 = scmp.eq.s32.totalorder %s24, 1
      %p127 = por %p125, %p126
      %p129 = scmp.ne.s32.totalorder %s112, %s128
      %p130 = scmp.eq.s32.totalorder %s24, 0
      %p131 = por %p129, %p130
      %s132 = ssub.s32 %s26, %s33
      %p133 = scmp.eq.s32.totalorder %s132, 0
      %s135 = sadd.s32 %s134, 1
      %s136 = scalar_select %p133, %s134, %s135
      %p139 = pneg %p133
      %p140 = scmp.eq.s32.totalorder %s18, 1
      %p141 = por %p139, %p140
      %p142 = scmp.ne.s32.totalorder %s134, %s137
      %p143 = scmp.eq.s32.totalorder %s18, 0
      %p144 = por %p142, %p143
      %p145 = scmp.ne.s32.totalorder %s134, %s137
      %p146 = scmp.eq.s32.totalorder %s23, 1
      %p147 = por %p145, %p146
      %p148 = scmp.ne.s32.totalorder %s137, %s138
      %p149 = scmp.eq.s32.totalorder %s23, 0
      %p150 = por %p148, %p149
      %p151 = scmp.ne.s32.totalorder %s137, %s138
      %p152 = scmp.eq.s32.totalorder %s24, 1
      %p153 = por %p151, %p152
      %p155 = scmp.ne.s32.totalorder %s138, %s154
      %p156 = scmp.eq.s32.totalorder %s24, 0
      %p157 = por %p155, %p156
      %s158 = ssub.s32 %s25, %s37
      %s159 = ssub.s32 %s26, %s33
      %s160 = sor.u32 %s158, %s159
      %p161 = scmp.eq.s32.totalorder %s160, 0
      %s163 = sadd.s32 %s162, 1
      %s164 = scalar_select %p161, %s162, %s163
      %p167 = pneg %p161
      %p168 = scmp.eq.s32.totalorder %s18, 1
      %p169 = por %p167, %p168
      %p170 = scmp.ne.s32.totalorder %s162, %s165
      %p171 = scmp.eq.s32.totalorder %s18, 0
      %p172 = por %p170, %p171
      %p173 = scmp.ne.s32.totalorder %s162, %s165
      %p174 = scmp.eq.s32.totalorder %s23, 1
      %p175 = por %p173, %p174
      %p176 = scmp.ne.s32.totalorder %s165, %s166
      %p177 = scmp.eq.s32.totalorder %s23, 0
      %p178 = por %p176, %p177
      %p179 = scmp.ne.s32.totalorder %s165, %s166
      %p180 = scmp.eq.s32.totalorder %s24, 1
      %p181 = por %p179, %p180
      %p183 = scmp.ne.s32.totalorder %s166, %s182
      %p184 = scmp.eq.s32.totalorder %s24, 0
      %p185 = por %p183, %p184
      %p186 = scmp.le.s32.totalorder 1, %s18
      %p187 = scmp.lt.s32.totalorder %s18, 3
      %p188 = pnand %p186, %p187
      %p189 = pneg %p188
      // Predicated region
      $region9: #{tpu_custom_call.1} parent=5 // pred_check
        _
      $region10: #{tpu_custom_call.1} parent=5 // pred_check_branch
        %191 = sbr.rel (%p188) target = $region12
      $region11: #{tpu_custom_call.1} parent=5 // pred_region
        %s192 = ssub.s32 %s18, 1
        // Predicated region
        $region13: #{tpu_custom_call.1} parent=11 // pred_check
          %p193 = pneg %p77
        $region14: #{tpu_custom_call.1} parent=11 // pred_check_branch
          %195 = sbr.rel (%p193) target = $region16
        $region15: #{tpu_custom_call.1} parent=11 // pred_region
          %s197 = ssub.s32 1024, 1024
          %198 = vsyncadd [#allocation7], %s197
          %s199 = sshll.u32 [#allocation6], 4
          %s200 = int_to_ptr.vmem [resolvable:$true] %s199
          %205 = dma.hbm_to_vmem [thread:$0]  %s1, 1024, %s200, [#allocation7], 64, 64, 4
        $region16: #{tpu_custom_call.1} parent=11 // pred_fallthru
          _
        // Predicated region
        $region17: #{tpu_custom_call.1} parent=11 // pred_check
          %p206 = pneg %p98
        $region18: #{tpu_custom_call.1} parent=11 // pred_check_branch
          %208 = sbr.rel (%p206) target = $region20
        $region19: #{tpu_custom_call.1} parent=11 // pred_region
          _
        $region20: #{tpu_custom_call.1} parent=11 // pred_fallthru
          _
        // Predicated region
        $region21: #{tpu_custom_call.1} parent=11 // pred_check
          %p209 = pneg %p124
        $region22: #{tpu_custom_call.1} parent=11 // pred_check_branch
          %211 = sbr.rel (%p209) target = $region24
        $region23: #{tpu_custom_call.1} parent=11 // pred_region
          %s213 = ssub.s32 1024, 1024
          %214 = vsyncadd [#allocation7], %s213
          %s215 = smul.addr %s28, 64
          %s216 = scalar_lea.hbm %s3, %s215
          %s217 = sshll.u32 [#allocation8], 4
          %s218 = int_to_ptr.vmem [resolvable:$true] %s217
          %223 = dma.hbm_to_vmem [thread:$0]  %s216, 1024, %s218, [#allocation7], 64, 64, 4
        $region24: #{tpu_custom_call.1} parent=11 // pred_fallthru
          _
        // Predicated region
        $region25: #{tpu_custom_call.1} parent=11 // pred_check
          %p224 = pneg %p150
        $region26: #{tpu_custom_call.1} parent=11 // pred_check_branch
          %226 = sbr.rel (%p224) target = $region28
        $region27: #{tpu_custom_call.1} parent=11 // pred_region
          %p227 = scmp.lt.s32.totalorder %s28, 0
          %s228 = scalar_select %p227, %s28, 0
          %s229 = scalar_lea.vmem %s4, %s228
        $region28: #{tpu_custom_call.1} parent=11 // pred_fallthru
          _
      $region12: #{tpu_custom_call.1} parent=5 // pred_fallthru
        _
      %p230 = scmp.lt.s32.totalorder %s18, 2
      // Predicated region
      $region29: #{tpu_custom_call.1} parent=5 // pred_check
        %p231 = pneg %p230
      $region30: #{tpu_custom_call.1} parent=5 // pred_check_branch
        %233 = sbr.rel (%p231) target = $region32
      $region31: #{tpu_custom_call.1} parent=5 // pred_region
        // Predicated region
        $region33: #{tpu_custom_call.1} parent=31 // pred_check
          %p234 = pneg %p50
        $region34: #{tpu_custom_call.1} parent=31 // pred_check_branch
          %236 = sbr.rel (%p234) target = $region36
        $region35: #{tpu_custom_call.1} parent=31 // pred_region
          %s237 = sand.u32 %s40, 1
          %s238 = scalar_lea.sflag [#allocation4], %s237
          %s239 = sand.u32 %s40, 1
          %s240 = smul.addr %s239, 4
          %s241 = scalar_lea.vmem [#allocation3], %s240
          %s243 = ssub.s32 64, 64
          %244 = vsyncadd %s238, %s243
          %s245 = smul.addr %s25, 64
          %s246 = scalar_lea.hbm %s0, %s245
          %s248 = sshll.u32 %s241, 4
          %s249 = int_to_ptr.vmem [resolvable:$true] %s248
          %251 = dma.hbm_to_vmem [thread:$0]  %s246, 64, %s249, %s238
        $region36: #{tpu_custom_call.1} parent=31 // pred_fallthru
          _
      $region32: #{tpu_custom_call.1} parent=5 // pred_fallthru
        _
      %p252 = scmp.le.s32.totalorder 1, %s18
      %p253 = scmp.lt.s32.totalorder %s18, 3
      %p254 = pnand %p252, %p253
      %p255 = pneg %p254
      // Predicated region
      $region37: #{tpu_custom_call.1} parent=5 // pred_check
        _
      $region38: #{tpu_custom_call.1} parent=5 // pred_check_branch
        %257 = sbr.rel (%p254) target = $region40
      $region39: #{tpu_custom_call.1} parent=5 // pred_region
        %s258 = ssub.s32 %s18, 1
        %s259 = sand.u32 %s43, 1
        %s260 = scalar_lea.sflag [#allocation4], %s259
        %s261 = sand.u32 %s43, 1
        %s262 = smul.addr %s261, 4
        %s263 = scalar_lea.vmem [#allocation3], %s262
        // Predicated region
        $region41: #{tpu_custom_call.1} parent=39 // pred_check
          %p264 = pneg %p56
        $region42: #{tpu_custom_call.1} parent=39 // pred_check_branch
          %266 = sbr.rel (%p264) target = $region44
        $region43: #{tpu_custom_call.1} parent=39 // pred_region
          %267 = dma.done %s260, 64
        $region44: #{tpu_custom_call.1} parent=39 // pred_fallthru
          _
        // Predicated region
        $region45: #{tpu_custom_call.1} parent=39 // pred_check
          %p268 = pneg %p77
        $region46: #{tpu_custom_call.1} parent=39 // pred_check_branch
          %270 = sbr.rel (%p268) target = $region48
        $region47: #{tpu_custom_call.1} parent=39 // pred_region
          %271 = dma.done [#allocation7], 1024
        $region48: #{tpu_custom_call.1} parent=39 // pred_fallthru
          _
        // Predicated region
        $region49: #{tpu_custom_call.1} parent=39 // pred_check
          %p272 = pneg %p124
        $region50: #{tpu_custom_call.1} parent=39 // pred_check_branch
          %274 = sbr.rel (%p272) target = $region52
        $region51: #{tpu_custom_call.1} parent=39 // pred_region
          %275 = dma.done [#allocation7], 1024
        $region52: #{tpu_custom_call.1} parent=39 // pred_fallthru
          _
        %s276 = sand.u32 %s43, 1
        %s277 = scalar_lea.sflag [#allocation4], %s276
        %s278 = sand.u32 %s43, 1
        %s279 = smul.addr %s278, 4
        %s280 = scalar_lea.vmem [#allocation3], %s279
        %p281 = pneg %p56
        %p282 = pneg %p53
        %p283 = pneg %p77
        %p284 = pneg %p74
        %p285 = pneg %p98
        %p286 = pneg %p95
        %p287 = pneg %p124
        %p288 = pneg %p121
        %p289 = scmp.lt.s32.totalorder %s28, 0
        %s290 = scalar_select %p289, %s28, 0
        %s291 = scalar_lea.vmem %s4, %s290
        %p292 = pneg %p150
        %p293 = pneg %p147
        %p294 = pneg %p178
        %p295 = pneg %p175
        %s296 = sand.u32 %s165, 1
        %s297 = scalar_lea.sflag [#allocation5], %s296
        %s298 = sand.u32 %s165, 1
        %s299 = smul.addr %s298, 8
        %s300 = scalar_lea.vmem [#allocation9], %s299
        %p301 = scmp.lt.s32.totalorder %s28, 0
        %s302 = scalar_select %p301, %s28, 0
        %s303 = scalar_lea.vmem %s4, %s302
        %p305 = scmp.eq.s32.totalorder %s28, 0
        // Predicated region
        $region53: #{tpu_custom_call.1} parent=39 // pred_check
          %p306 = pneg %p305
        $region54: #{tpu_custom_call.1} parent=39 // pred_check_branch
          %308 = sbr.rel (%p306) target = $region56
        $region55: #{tpu_custom_call.1} parent=39 // pred_region
          %v309 = vld [vmem:[%s263] sm:$0xf]
          %v310 = vld [vmem:[#allocation6] sm:$0xf]
          %v311 = vld [vmem:[#allocation6 + $0x4] sm:$0xf]
          %v312 = vld [vmem:[#allocation6 + $0x8] sm:$0xf]
          %v313 = vld [vmem:[#allocation6 + $0xc] sm:$0xf]
          %v314 = vld [vmem:[#allocation6 + $0x10] sm:$0xf]
          %v315 = vld [vmem:[#allocation6 + $0x14] sm:$0xf]
          %v316 = vld [vmem:[#allocation6 + $0x18] sm:$0xf]
          %v317 = vld [vmem:[#allocation6 + $0x1c] sm:$0xf]
          %v318 = vld [vmem:[#allocation6 + $0x20] sm:$0xf]
          %v319 = vld [vmem:[#allocation6 + $0x24] sm:$0xf]
          %v320 = vld [vmem:[#allocation6 + $0x28] sm:$0xf]
          %v321 = vld [vmem:[#allocation6 + $0x2c] sm:$0xf]
          %v322 = vld [vmem:[#allocation6 + $0x30] sm:$0xf]
          %v323 = vld [vmem:[#allocation6 + $0x34] sm:$0xf]
          %v324 = vld [vmem:[#allocation6 + $0x38] sm:$0xf]
          %v325 = vld [vmem:[#allocation6 + $0x3c] sm:$0xf]
          %v326 = vld [vmem:[%s2] sm:$0x1]
          %v328 = vlaneseq
          %v329 = vshrl.u32 %v328, 7
          %v330 = vsub.s32 0, %v329
          %v331 = vrot.slane %v326, %v330
          %v349 = vunpack.c.l.b16 %v310
          %v350 = vunpack.c.l.b16 %v311
          %v351 = vunpack.c.l.b16 %v312
          %v352 = vunpack.c.l.b16 %v313
          %v353 = vunpack.c.l.b16 %v314
          %v354 = vunpack.c.l.b16 %v315
          %v355 = vunpack.c.l.b16 %v316
          %v356 = vunpack.c.l.b16 %v317
          %v357 = vunpack.c.l.b16 %v318
          %v358 = vunpack.c.l.b16 %v319
          %v359 = vunpack.c.l.b16 %v320
          %v360 = vunpack.c.l.b16 %v321
          %v361 = vunpack.c.l.b16 %v322
          %v362 = vunpack.c.l.b16 %v323
          %v363 = vunpack.c.l.b16 %v324
          %v364 = vunpack.c.l.b16 %v325
          %v365 = vpack.c.b16 %v350, %v349
          %v366 = vpack.c.b16 %v352, %v351
          %v367 = vpack.c.b16 %v354, %v353
          %v368 = vpack.c.b16 %v356, %v355
          %v369 = vpack.c.b16 %v358, %v357
          %v370 = vpack.c.b16 %v360, %v359
          %v371 = vpack.c.b16 %v362, %v361
          %v372 = vpack.c.b16 %v364, %v363
          %381 = vmatprep.subr.bf16.mxu0 0
          %382 = vmatpush1.bf16.msra.mxu0 %v365
          %383 = vmatprep.subr.bf16.mxu0 0
          %384 = vmatpush1.bf16.msra.mxu0 %v366
          %385 = vmatprep.subr.bf16.mxu0 0
          %386 = vmatpush1.bf16.msra.mxu0 %v367
          %387 = vmatprep.subr.bf16.mxu0 0
          %388 = vmatpush1.bf16.msra.mxu0 %v368
          %389 = vmatprep.subr.bf16.mxu0 0
          %390 = vmatpush1.bf16.msra.mxu0 %v369
          %391 = vmatprep.subr.bf16.mxu0 0
          %392 = vmatpush1.bf16.msra.mxu0 %v370
          %393 = vmatprep.subr.bf16.mxu0 0
          %394 = vmatpush1.bf16.msra.mxu0 %v371
          %395 = vmatprep.subr.bf16.mxu0 0
          %396 = vmatpush1.bf16.msra.mxu0 %v372
          %397 = vmatprep.subr.bf16.mxu0 0
          %398 = vmatpush1.bf16.msra.mxu0 0
          %399 = vmatprep.subr.bf16.mxu0 0
          %400 = vmatpush1.bf16.msra.mxu0 0
          %401 = vmatprep.subr.bf16.mxu0 0
          %402 = vmatpush1.bf16.msra.mxu0 0
          %403 = vmatprep.subr.bf16.mxu0 0
          %404 = vmatpush1.bf16.msra.mxu0 0
          %405 = vmatprep.subr.bf16.mxu0 0
          %406 = vmatpush1.bf16.msra.mxu0 0
          %407 = vmatprep.subr.bf16.mxu0 0
          %408 = vmatpush1.bf16.msra.mxu0 0
          %409 = vmatprep.subr.bf16.mxu0 0
          %410 = vmatpush1.bf16.msra.mxu0 0
          %411 = vmatprep.subr.bf16.mxu0 0
          %412 = vmatpush1.bf16.msra.mxu0 0
          %413 = vmatprep.mubr.bf16.mxu0 0
          %414 = vmatmul.mubr.bf16.gmra.mrb[0].mxu0 %v309
          %v415 = vpop.f32.mrb[0].mxu0
          %v416 = vadd.f32 %v331, %v415
          %v417 = vpop.f32.mrb[0].mxu0
          %v418 = vpop.f32.mrb[0].mxu0
          %v419 = vpop.f32.mrb[0].mxu0
          %420 = vdwg.mxu0
          %v421 = vmax.f32 %v416, 0.0
          %v422 = vpack.c.bf16 %v421, %v421
          %423 = vst [vmem:[#allocation2] sm:$0xf] %v422
        $region56: #{tpu_custom_call.1} parent=39 // pred_fallthru
          _
        %v424 = vld [vmem:[#allocation2] sm:$0xf]
        %v425 = vld [vmem:[#allocation8] sm:$0xf]
        %v426 = vld [vmem:[#allocation8 + $0x4] sm:$0xf]
        %v427 = vld [vmem:[#allocation8 + $0x8] sm:$0xf]
        %v428 = vld [vmem:[#allocation8 + $0xc] sm:$0xf]
        %v429 = vld [vmem:[#allocation8 + $0x10] sm:$0xf]
        %v430 = vld [vmem:[#allocation8 + $0x14] sm:$0xf]
        %v431 = vld [vmem:[#allocation8 + $0x18] sm:$0xf]
        %v432 = vld [vmem:[#allocation8 + $0x1c] sm:$0xf]
        %v433 = vld [vmem:[#allocation8 + $0x20] sm:$0xf]
        %v434 = vld [vmem:[#allocation8 + $0x24] sm:$0xf]
        %v435 = vld [vmem:[#allocation8 + $0x28] sm:$0xf]
        %v436 = vld [vmem:[#allocation8 + $0x2c] sm:$0xf]
        %v437 = vld [vmem:[#allocation8 + $0x30] sm:$0xf]
        %v438 = vld [vmem:[#allocation8 + $0x34] sm:$0xf]
        %v439 = vld [vmem:[#allocation8 + $0x38] sm:$0xf]
        %v440 = vld [vmem:[#allocation8 + $0x3c] sm:$0xf]
        %v441 = vld [vmem:[%s303] sm:$0x1]
        %v443 = vlaneseq
        %v444 = vshrl.u32 %v443, 7
        %v445 = vsub.s32 0, %v444
        %v446 = vrot.slane %v441, %v445
        %v464 = vunpack.c.l.b16 %v425
        %v465 = vunpack.c.l.b16 %v426
        %v466 = vunpack.c.l.b16 %v427
        %v467 = vunpack.c.l.b16 %v428
        %v468 = vunpack.c.l.b16 %v429
        %v469 = vunpack.c.l.b16 %v430
        %v470 = vunpack.c.l.b16 %v431
        %v471 = vunpack.c.l.b16 %v432
        %v472 = vunpack.c.l.b16 %v433
        %v473 = vunpack.c.l.b16 %v434
        %v474 = vunpack.c.l.b16 %v435
        %v475 = vunpack.c.l.b16 %v436
        %v476 = vunpack.c.l.b16 %v437
        %v477 = vunpack.c.l.b16 %v438
        %v478 = vunpack.c.l.b16 %v439
        %v479 = vunpack.c.l.b16 %v440
        %v480 = vpack.c.b16 %v465, %v464
        %v481 = vpack.c.b16 %v467, %v466
        %v482 = vpack.c.b16 %v469, %v468
        %v483 = vpack.c.b16 %v471, %v470
        %v484 = vpack.c.b16 %v473, %v472
        %v485 = vpack.c.b16 %v475, %v474
        %v486 = vpack.c.b16 %v477, %v476
        %v487 = vpack.c.b16 %v479, %v478
        %496 = vmatprep.subr.bf16.mxu0 0
        %497 = vmatpush1.bf16.msra.mxu0 %v480
        %498 = vmatprep.subr.bf16.mxu0 0
        %499 = vmatpush1.bf16.msra.mxu0 %v481
        %500 = vmatprep.subr.bf16.mxu0 0
        %501 = vmatpush1.bf16.msra.mxu0 %v482
        %502 = vmatprep.subr.bf16.mxu0 0
        %503 = vmatpush1.bf16.msra.mxu0 %v483
        %504 = vmatprep.subr.bf16.mxu0 0
        %505 = vmatpush1.bf16.msra.mxu0 %v484
        %506 = vmatprep.subr.bf16.mxu0 0
        %507 = vmatpush1.bf16.msra.mxu0 %v485
        %508 = vmatprep.subr.bf16.mxu0 0
        %509 = vmatpush1.bf16.msra.mxu0 %v486
        %510 = vmatprep.subr.bf16.mxu0 0
        %511 = vmatpush1.bf16.msra.mxu0 %v487
        %512 = vmatprep.subr.bf16.mxu0 0
        %513 = vmatpush1.bf16.msra.mxu0 0
        %514 = vmatprep.subr.bf16.mxu0 0
        %515 = vmatpush1.bf16.msra.mxu0 0
        %516 = vmatprep.subr.bf16.mxu0 0
        %517 = vmatpush1.bf16.msra.mxu0 0
        %518 = vmatprep.subr.bf16.mxu0 0
        %519 = vmatpush1.bf16.msra.mxu0 0
        %520 = vmatprep.subr.bf16.mxu0 0
        %521 = vmatpush1.bf16.msra.mxu0 0
        %522 = vmatprep.subr.bf16.mxu0 0
        %523 = vmatpush1.bf16.msra.mxu0 0
        %524 = vmatprep.subr.bf16.mxu0 0
        %525 = vmatpush1.bf16.msra.mxu0 0
        %526 = vmatprep.subr.bf16.mxu0 0
        %527 = vmatpush1.bf16.msra.mxu0 0
        %528 = vmatprep.mubr.bf16.mxu0 0
        %529 = vmatmul.mubr.bf16.gmra.mrb[0].mxu0 %v424
        %v530 = vpop.f32.mrb[0].mxu0
        %v531 = vadd.f32 %v446, %v530
        %v532 = vpop.f32.mrb[0].mxu0
        %v533 = vpop.f32.mrb[0].mxu0
        %v534 = vpop.f32.mrb[0].mxu0
        %535 = vdwg.mxu0
        %536 = vst [vmem:[%s300] sm:$0xff] %v531
        %s537 = sand.u32 %s165, 1
        %s538 = scalar_lea.sflag [#allocation5], %s537
        %s539 = sand.u32 %s165, 1
        %s540 = smul.addr %s539, 8
        %s541 = scalar_lea.vmem [#allocation9], %s540
        // Predicated region
        $region57: #{tpu_custom_call.1} parent=39 // pred_check
          %p542 = pneg %p175
        $region58: #{tpu_custom_call.1} parent=39 // pred_check_branch
          %544 = sbr.rel (%p542) target = $region60
        $region59: #{tpu_custom_call.1} parent=39 // pred_region
          %s546 = ssub.s32 128, 128
          %547 = vsyncadd %s538, %s546
          %s548 = sadd.s32 %s28, %s27
          %s549 = smul.addr %s548, 128
          %s550 = scalar_lea.hbm %s5, %s549
          %s552 = sshll.u32 %s541, 4
          %s553 = int_to_ptr.vmem [resolvable:$true] %s552
          %555 = dma.vmem_to_hbm [thread:$0]  %s553, 128, %s550, %s538
        $region60: #{tpu_custom_call.1} parent=39 // pred_fallthru
          _
      $region40: #{tpu_custom_call.1} parent=5 // pred_fallthru
        _
      %p556 = scmp.le.s32.totalorder 2, %s18
      // Predicated region
      $region61: #{tpu_custom_call.1} parent=5 // pred_check
        %p557 = pneg %p556
      $region62: #{tpu_custom_call.1} parent=5 // pred_check_branch
        %559 = sbr.rel (%p557) target = $region64
      $region63: #{tpu_custom_call.1} parent=5 // pred_region
        %s560 = ssub.s32 %s18, 2
        // Predicated region
        $region65: #{tpu_custom_call.1} parent=63 // pred_check
          %p561 = pneg %p181
        $region66: #{tpu_custom_call.1} parent=63 // pred_check_branch
          %563 = sbr.rel (%p561) target = $region68
        $region67: #{tpu_custom_call.1} parent=63 // pred_region
          %s564 = sand.u32 %s166, 1
          %s565 = scalar_lea.sflag [#allocation5], %s564
          %s566 = sand.u32 %s166, 1
          %s567 = smul.addr %s566, 8
          %s568 = scalar_lea.vmem [#allocation9], %s567
          %569 = dma.done %s565, 128
        $region68: #{tpu_custom_call.1} parent=63 // pred_fallthru
          _
      $region64: #{tpu_custom_call.1} parent=5 // pred_fallthru
        _
    $region6: #{tpu_custom_call.1} parent=1 // loop_footer
      %s22 = sadd.s32 1, %s18
    $region7: #{tpu_custom_call.1} parent=1 // loop_footer_branch
      %17 = sbr.rel target = $region3
    $region8: #{tpu_custom_call.1} parent=1 // loop_exit
      _
    %570 = vsyncpa [#allocation4], 1
    %s571 = scalar_lea.sflag [#allocation4], 1
    %572 = vsyncpa %s571, 1
    %573 = vsyncpa [#allocation7], 1
    %574 = vsyncpa [#allocation5], 1
    %s575 = scalar_lea.sflag [#allocation5], 1
    %576 = vsyncpa %s575, 1

</llo_original>
